<compile_context>
chip_gen: v5e
topology: v5e:2x2
jax: 0.10.0
libtpu: 0.0.40
codegen_flags: <defaults>
</compile_context>

<pallas_src>
import functools

import jax
import jax.numpy as jnp
from jax.experimental import pallas as pl
from jax.experimental.pallas import tpu as pltpu


def _round_up(x, m):
    return ((x + m - 1) // m) * m


def _endetect_kernel(tok_ref, w1e_ref, b1_ref, w2_ref, b2_ref, w3_ref, b3_ref,
                     out_ref):
    tok = tok_ref[...]                                   # [1, TN] int32 (lane-major)
    vocab = w1e_ref.shape[1]
    tn = tok.shape[1]

    # One-hot^T [V, TN] in f32; out-of-range/negative ids give a zero row.
    onehot_t = (jax.lax.broadcasted_iota(jnp.int32, (vocab, tn), 0)
                == tok).astype(jnp.float32)

    # Fused embedding + L1: (W1 @ Emb^T) @ onehot = W1 @ Emb[token].
    h1 = jnp.dot(w1e_ref[...], onehot_t,
                 preferred_element_type=jnp.float32)     # [H, TN]
    h1 = jnp.maximum(h1 + b1_ref[...], 0.0)

    # L2 + bias + ReLU.
    h2 = jnp.dot(w2_ref[...], h1,
                 preferred_element_type=jnp.float32)     # [H4, TN]
    h2 = jnp.maximum(h2 + b2_ref[...], 0.0)

    # L3 (out_features = 1): VPU multiply + sublane reduce -> [1, TN],
    # avoiding a 1-column MXU matmul and keeping the store lane-dense.
    logit = jnp.sum(h2 * w3_ref[...], axis=0, keepdims=True) + b3_ref[...]
    out_ref[...] = jax.nn.sigmoid(logit)


@functools.partial(jax.jit, static_argnames=("tile_n", "vmem_limit_bytes"))
def endetect_forward(tokens, emb, w1, b1, w2, b2, w3, b3, *,
                     tile_n=32768,                       # v7x-safe; 65536 on v5e/v6e
                     vmem_limit_bytes=48 * 1024 * 1024): # < v7x 64 MiB; 96 MiB on v5e/v6e
    """tokens: int [B, S]. Weights in PyTorch layout (W: [out, in], b: [out])."""
    B, S = tokens.shape
    N = B * S
    V, E = emb.shape
    H = w1.shape[0]
    H4 = w2.shape[0]

    # Row-tile selection: big tiles amortize per-grid-step overhead.
    if N <= tile_n:
        tn = N                                           # single full-array block: no pad/slice
        n_pad = N
    else:
        assert tile_n % 256 == 0, "tile_n must be a multiple of 256"
        tn = tile_n
        n_pad = _round_up(N, tn)

    tok = tokens.reshape(1, N).astype(jnp.int32)
    if n_pad != N:
        # Padded slots use id 0; their outputs are sliced away below.
        # TODO(synk): mask the ragged tail in-kernel (pl.when + bounded pl.ds)
        # to drop this extra HBM pad/slice traffic at very large N.
        tok = jnp.pad(tok, ((0, 0), (0, n_pad - N)))

    # Glue: fuse embedding+L1, transposed feature-major layout, all f32.
    # NOTE: init_weights overwrites the padding row (row 0) with uniform values,
    # so no zeroing is performed here (matches the PyTorch module's forward).
    w1e = (w1.astype(jnp.float32) @ emb.T.astype(jnp.float32))   # [H, V]
    b1c = b1.reshape(H, 1).astype(jnp.float32)
    w2c = w2.astype(jnp.float32)                                  # [H4, H]
    b2c = b2.reshape(H4, 1).astype(jnp.float32)
    w3c = w3.reshape(1, H4).T.astype(jnp.float32)                 # [H4, 1]
    b3c = b3.reshape(1, 1).astype(jnp.float32)

    def resident(shape):
        # Full-array block, same block index every step -> stays in VMEM.
        # TODO(synk): pipeline_mode=pl.Buffered(1) for these loop-invariant
        # blocks once single-buffering is confirmed on the target jax version.
        return pl.BlockSpec(shape, lambda i: (0,) * len(shape))

    out = pl.pallas_call(
        _endetect_kernel,
        out_shape=jax.ShapeDtypeStruct((1, n_pad), jnp.float32),
        grid=(n_pad // tn,),
        in_specs=[
            pl.BlockSpec((1, tn), lambda i: (0, i)),     # tokens (tiled)
            resident((H, V)),                            # W1 @ Emb^T
            resident((H, 1)),                            # b1
            resident((H4, H)),                           # W2
            resident((H4, 1)),                           # b2
            resident((H4, 1)),                           # W3 (as column)
            resident((1, 1)),                            # b3
        ],
        out_specs=pl.BlockSpec((1, tn), lambda i: (0, i)),
        compiler_params=pltpu.CompilerParams(
            dimension_semantics=("parallel",),           # v7x: shard row tiles over 2 TCs
            vmem_limit_bytes=vmem_limit_bytes,
        ),
    )(tok, w1e, b1c, w2c, b2c, w3c, b3c)

    if n_pad != N:
        out = out[:, :N]
    return out.reshape(B, S, 1)


def init_params(key, vocab_size, embedding_dim, hidden_units, init_range=0.5):
    """Matches ENDetectionModel.init_weights: uniform(-0.5, 0.5) weights, zero biases."""
    ks = jax.random.split(key, 4)
    h4 = hidden_units // 4
    emb = jax.random.uniform(ks[0], (vocab_size, embedding_dim),
                             jnp.float32, -init_range, init_range)
    w1 = jax.random.uniform(ks[1], (hidden_units, embedding_dim),
                            jnp.float32, -init_range, init_range)
    b1 = jnp.zeros((hidden_units,), jnp.float32)
    w2 = jax.random.uniform(ks[2], (h4, hidden_units),
                            jnp.float32, -init_range, init_range)
    b2 = jnp.zeros((h4,), jnp.float32)
    w3 = jax.random.uniform(ks[3], (1, h4),
                            jnp.float32, -init_range, init_range)
    b3 = jnp.zeros((1,), jnp.float32)
    return emb, w1, b1, w2, b2, w3, b3


if __name__ == "__main__":
    VOCAB = 64
    EMB = 32
    HIDDEN = 32
    BATCH = 2
    SEQ = 8

    key = jax.random.PRNGKey(0)
    pkey, tkey = jax.random.split(key)
    params = init_params(pkey, VOCAB, EMB, HIDDEN)

    tokens = jax.random.randint(tkey, (BATCH, SEQ), 0, VOCAB, dtype=jnp.int32)

    out = endetect_forward(tokens, *params)
    out = jax.block_until_ready(out)

    # Pure-JAX f32 reference (tight tolerance: kernel is now all-f32).
    emb, w1, b1, w2, b2, w3, b3 = params
    x = emb[tokens]                                      # [B, S, E]
    h1 = jnp.maximum(x @ w1.T + b1, 0.0)
    h2 = jnp.maximum(h1 @ w2.T + b2, 0.0)
    ref = jax.nn.sigmoid(h2 @ w3.T + b3)                 # [B, S, 1]

    assert out.shape == (BATCH, SEQ, 1), out.shape
    assert jnp.allclose(out, ref, atol=1e-5, rtol=1e-5), (
        float(jnp.max(jnp.abs(out - ref))))
    print("KERNEL_OK")
</pallas_src>

<mosaic_0001>
module attributes {stable_mosaic.version = 11 : i64} {
  func.func @_endetect_kernel(%arg0: i32, %arg1: memref<1x16xi32, #tpu.memory_space<vmem>>, %arg2: memref<32x64xf32, #tpu.memory_space<vmem>>, %arg3: memref<32x1xf32, #tpu.memory_space<vmem>>, %arg4: memref<8x32xf32, #tpu.memory_space<vmem>>, %arg5: memref<8x1xf32, #tpu.memory_space<vmem>>, %arg6: memref<8x1xf32, #tpu.memory_space<vmem>>, %arg7: memref<1x1xf32, #tpu.memory_space<vmem>>, %arg8: memref<1x16xf32, #tpu.memory_space<vmem>>) attributes {dimension_semantics = [#tpu.dimension_semantics<parallel>], iteration_bounds = array<i64: 1>, scalar_prefetch = 0 : i64, scratch_operands = 0 : i64, tpu.core_type = #tpu.core_type<tc>, window_params = [{transform_indices = @transform_0, window_bounds = array<i64: 1, 16>}, {pipeline_mode = #tpu.pipeline_mode<synchronous>, transform_indices = @transform_1, window_bounds = array<i64: 32, 64>}, {pipeline_mode = #tpu.pipeline_mode<synchronous>, transform_indices = @transform_2, window_bounds = array<i64: 32, 1>}, {pipeline_mode = #tpu.pipeline_mode<synchronous>, transform_indices = @transform_3, window_bounds = array<i64: 8, 32>}, {pipeline_mode = #tpu.pipeline_mode<synchronous>, transform_indices = @transform_4, window_bounds = array<i64: 8, 1>}, {pipeline_mode = #tpu.pipeline_mode<synchronous>, transform_indices = @transform_5, window_bounds = array<i64: 8, 1>}, {pipeline_mode = #tpu.pipeline_mode<synchronous>, transform_indices = @transform_6, window_bounds = array<i64: 1, 1>}, {transform_indices = @transform_7, window_bounds = array<i64: 1, 16>}]} {
    %c0 = arith.constant 0 : index
    %c0_0 = arith.constant 0 : index
    %0 = vector.load %arg1[%c0, %c0_0] : memref<1x16xi32, #tpu.memory_space<vmem>>, vector<1x16xi32>
    %1 = tpu.iota {dimensions = array<i32: 0>} : vector<64x16xi32>
    %2 = vector.broadcast %0 : vector<1x16xi32> to vector<64x16xi32>
    %3 = arith.cmpi eq, %1, %2 : vector<64x16xi32>
    %4 = arith.extui %3 : vector<64x16xi1> to vector<64x16xi32>
    %5 = arith.sitofp %4 : vector<64x16xi32> to vector<64x16xf32>
    %c0_1 = arith.constant 0 : index
    %c0_2 = arith.constant 0 : index
    %6 = vector.load %arg2[%c0_1, %c0_2] : memref<32x64xf32, #tpu.memory_space<vmem>>, vector<32x64xf32>
    %cst = arith.constant dense<0.000000e+00> : vector<32x16xf32>
    %7 = tpu.matmul %6, %5, %cst {dimension_numbers = #tpu.dot_dimension_numbers<[1], [0], [0], [1], [0, 0, 1, 1], [], []>} : vector<32x64xf32>, vector<64x16xf32>, vector<32x16xf32> -> vector<32x16xf32>
    %c0_3 = arith.constant 0 : index
    %c0_4 = arith.constant 0 : index
    %8 = vector.load %arg3[%c0_3, %c0_4] : memref<32x1xf32, #tpu.memory_space<vmem>>, vector<32x1xf32>
    %9 = vector.broadcast %8 : vector<32x1xf32> to vector<32x16xf32>
    %10 = arith.addf %7, %9 : vector<32x16xf32>
    %cst_5 = arith.constant 0.000000e+00 : f32
    %11 = vector.broadcast %cst_5 : f32 to vector<32x16xf32>
    %12 = arith.maximumf %10, %11 : vector<32x16xf32>
    %c0_6 = arith.constant 0 : index
    %c0_7 = arith.constant 0 : index
    %13 = vector.load %arg4[%c0_6, %c0_7] : memref<8x32xf32, #tpu.memory_space<vmem>>, vector<8x32xf32>
    %cst_8 = arith.constant dense<0.000000e+00> : vector<8x16xf32>
    %14 = tpu.matmul %13, %12, %cst_8 {dimension_numbers = #tpu.dot_dimension_numbers<[1], [0], [0], [1], [0, 0, 1, 1], [], []>} : vector<8x32xf32>, vector<32x16xf32>, vector<8x16xf32> -> vector<8x16xf32>
    %c0_9 = arith.constant 0 : index
    %c0_10 = arith.constant 0 : index
    %15 = vector.load %arg5[%c0_9, %c0_10] : memref<8x1xf32, #tpu.memory_space<vmem>>, vector<8x1xf32>
    %16 = vector.broadcast %15 : vector<8x1xf32> to vector<8x16xf32>
    %17 = arith.addf %14, %16 : vector<8x16xf32>
    %cst_11 = arith.constant 0.000000e+00 : f32
    %18 = vector.broadcast %cst_11 : f32 to vector<8x16xf32>
    %19 = arith.maximumf %17, %18 : vector<8x16xf32>
    %c0_12 = arith.constant 0 : index
    %c0_13 = arith.constant 0 : index
    %20 = vector.load %arg6[%c0_12, %c0_13] : memref<8x1xf32, #tpu.memory_space<vmem>>, vector<8x1xf32>
    %21 = vector.broadcast %20 : vector<8x1xf32> to vector<8x16xf32>
    %22 = arith.mulf %19, %21 : vector<8x16xf32>
    %cst_14 = arith.constant dense<0.000000e+00> : vector<16xf32>
    %23 = vector.multi_reduction <add>, %22, %cst_14 [0] : vector<8x16xf32> to vector<16xf32>
    %24 = vector.shape_cast %23 : vector<16xf32> to vector<1x16xf32>
    %c0_15 = arith.constant 0 : index
    %c0_16 = arith.constant 0 : index
    %25 = vector.load %arg7[%c0_15, %c0_16] : memref<1x1xf32, #tpu.memory_space<vmem>>, vector<1x1xf32>
    %26 = vector.broadcast %25 : vector<1x1xf32> to vector<1x16xf32>
    %27 = arith.addf %24, %26 : vector<1x16xf32>
    %28 = arith.negf %27 : vector<1x16xf32>
    %29 = math.exp %28 : vector<1x16xf32>
    %cst_17 = arith.constant 1.000000e+00 : f32
    %30 = vector.broadcast %cst_17 : f32 to vector<1x16xf32>
    %31 = arith.addf %30, %29 : vector<1x16xf32>
    %32 = arith.divf %30, %31 : vector<1x16xf32>
    %c0_18 = arith.constant 0 : index
    %c0_19 = arith.constant 0 : index
    %33 = vector.load %arg8[%c0_18, %c0_19] : memref<1x16xf32, #tpu.memory_space<vmem>>, vector<1x16xf32>
    tpu.vector_store %arg8[%c0_18, %c0_19], %32 {strides = array<i32>} : memref<1x16xf32, #tpu.memory_space<vmem>>, vector<1x16xf32>,
    return
  }
  func.func @transform_0(%arg0: i32) -> (i32, i32) {
    %c0_i32 = arith.constant 0 : i32
    %c0_i32_0 = arith.constant 0 : i32
    return %c0_i32, %arg0 : i32, i32
  }
  func.func @transform_1(%arg0: i32) -> (i32, i32) {
    %c0_i32 = arith.constant 0 : i32
    %c0_i32_0 = arith.constant 0 : i32
    %c0_i32_1 = arith.constant 0 : i32
    return %c0_i32, %c0_i32_0 : i32, i32
  }
  func.func @transform_2(%arg0: i32) -> (i32, i32) {
    %c0_i32 = arith.constant 0 : i32
    %c0_i32_0 = arith.constant 0 : i32
    %c0_i32_1 = arith.constant 0 : i32
    return %c0_i32, %c0_i32_0 : i32, i32
  }
  func.func @transform_3(%arg0: i32) -> (i32, i32) {
    %c0_i32 = arith.constant 0 : i32
    %c0_i32_0 = arith.constant 0 : i32
    %c0_i32_1 = arith.constant 0 : i32
    return %c0_i32, %c0_i32_0 : i32, i32
  }
  func.func @transform_4(%arg0: i32) -> (i32, i32) {
    %c0_i32 = arith.constant 0 : i32
    %c0_i32_0 = arith.constant 0 : i32
    %c0_i32_1 = arith.constant 0 : i32
    return %c0_i32, %c0_i32_0 : i32, i32
  }
  func.func @transform_5(%arg0: i32) -> (i32, i32) {
    %c0_i32 = arith.constant 0 : i32
    %c0_i32_0 = arith.constant 0 : i32
    %c0_i32_1 = arith.constant 0 : i32
    return %c0_i32, %c0_i32_0 : i32, i32
  }
  func.func @transform_6(%arg0: i32) -> (i32, i32) {
    %c0_i32 = arith.constant 0 : i32
    %c0_i32_0 = arith.constant 0 : i32
    %c0_i32_1 = arith.constant 0 : i32
    return %c0_i32, %c0_i32_0 : i32, i32
  }
  func.func @transform_7(%arg0: i32) -> (i32, i32) {
    %c0_i32 = arith.constant 0 : i32
    %c0_i32_0 = arith.constant 0 : i32
    return %c0_i32, %arg0 : i32, i32
  }
}

</mosaic_0001>

<llo_original>
// kernel: endetect_forward.1
$region0: #{endetect_forward.1}
  #allocation0 [shape = 'u32[]', space=smem, size = 0x4, offset = 0x4, fixed_abs, tag = 'smem constant byte address 0x4 - core index']
  #allocation1 [shape = 'u32[72,128]{1,0:T(1,128)}', space=vmem, size = 0x9000, scoped, tag = 'internal scratch']
  #allocation2 [shape = 'f32[1,1]{1,0:T(1,128)S(1)}', space=vmem, size = 0x200, scoped, tag = 'scoped memory for endetect_forward.1']
  %s0 = inlined_call_operand.vmem [shape: s32[1,16], index: 0, kind: input, shape index: {}]
  %s1 = inlined_call_operand.vmem [shape: f32[32,64], index: 1, kind: input, shape index: {}]
  %s2 = inlined_call_operand.vmem [shape: f32[32,1], index: 2, kind: input, shape index: {}]
  %s3 = inlined_call_operand.vmem [shape: f32[8,32], index: 3, kind: input, shape index: {}]
  %s4 = inlined_call_operand.vmem [shape: f32[8,1], index: 4, kind: input, shape index: {}]
  %s5 = inlined_call_operand.vmem [shape: f32[8,1], index: 5, kind: input, shape index: {}]
  %s6 = inlined_call_operand.<no memory space> [shape: f32[1,1], index: 6, kind: input, shape index: {}]
  %s7 = inlined_call_operand.vmem [shape: f32[1,16], index: 7, kind: output, shape index: {}]
  %s8 = sld [smem:[#allocation0]]
  $region38: #{endetect_forward.1} parent=0
    _
  %s10 = ssub.s32 1, %s8
  %s11 = scalar_select 0, %s10, %s8
  %v12 = vstv %s6
  %13 = vst [vmem:[#allocation2] sm:$0x1] %v12
  // Predicated region
  $region2: #{endetect_forward.1} parent=0 // pred_check
    _
  $region3: #{endetect_forward.1} parent=0 // pred_check_branch
    %15 = sbr.rel (0) target = $region5
  $region4: #{endetect_forward.1} parent=0 // pred_region
    _
  $region5: #{endetect_forward.1} parent=0 // pred_fallthru
    _
  // Predicated region
  $region6: #{endetect_forward.1} parent=0 // pred_check
    _
  $region7: #{endetect_forward.1} parent=0 // pred_check_branch
    %17 = sbr.rel (0) target = $region9
  $region8: #{endetect_forward.1} parent=0 // pred_region
    _
  $region9: #{endetect_forward.1} parent=0 // pred_fallthru
    _
  // Predicated region
  $region10: #{endetect_forward.1} parent=0 // pred_check
    _
  $region11: #{endetect_forward.1} parent=0 // pred_check_branch
    %19 = sbr.rel (0) target = $region13
  $region12: #{endetect_forward.1} parent=0 // pred_region
    _
  $region13: #{endetect_forward.1} parent=0 // pred_fallthru
    _
  // Predicated region
  $region14: #{endetect_forward.1} parent=0 // pred_check
    _
  $region15: #{endetect_forward.1} parent=0 // pred_check_branch
    %21 = sbr.rel (0) target = $region17
  $region16: #{endetect_forward.1} parent=0 // pred_region
    _
  $region17: #{endetect_forward.1} parent=0 // pred_fallthru
    _
  // Predicated region
  $region18: #{endetect_forward.1} parent=0 // pred_check
    _
  $region19: #{endetect_forward.1} parent=0 // pred_check_branch
    %23 = sbr.rel (0) target = $region21
  $region20: #{endetect_forward.1} parent=0 // pred_region
    _
  $region21: #{endetect_forward.1} parent=0 // pred_fallthru
    _
  // Predicated region
  $region22: #{endetect_forward.1} parent=0 // pred_check
    _
  $region23: #{endetect_forward.1} parent=0 // pred_check_branch
    %25 = sbr.rel (0) target = $region25
  $region24: #{endetect_forward.1} parent=0 // pred_region
    _
  $region25: #{endetect_forward.1} parent=0 // pred_fallthru
    _
  // Predicated region
  $region26: #{endetect_forward.1} parent=0 // pred_check
    _
  $region27: #{endetect_forward.1} parent=0 // pred_check_branch
    %27 = sbr.rel (0) target = $region29
  $region28: #{endetect_forward.1} parent=0 // pred_region
    _
  $region29: #{endetect_forward.1} parent=0 // pred_fallthru
    _
  %v28 = vld [vmem:[%s0] sm:$0x1]
  %v29 = vlaneseq
  %v30 = vshrl.u32 %v29, 7
  %v31 = vadd.s32 %v30, 8
  %v32 = vadd.s32 %v30, 16
  %v33 = vadd.s32 %v30, 24
  %v34 = vadd.s32 %v30, 32
  %v35 = vadd.s32 %v30, 40
  %v36 = vadd.s32 %v30, 48
  %v37 = vadd.s32 %v30, 56
  %v38 = vperm.slane %v28, 0
  %vm39 = vcmp.eq.s32.totalorder %v30, %v38
  %vm40 = vcmp.eq.s32.totalorder %v31, %v38
  %vm41 = vcmp.eq.s32.totalorder %v32, %v38
  %vm42 = vcmp.eq.s32.totalorder %v33, %v38
  %vm43 = vcmp.eq.s32.totalorder %v34, %v38
  %vm44 = vcmp.eq.s32.totalorder %v35, %v38
  %vm45 = vcmp.eq.s32.totalorder %v36, %v38
  %vm46 = vcmp.eq.s32.totalorder %v37, %v38
  %v47 = vsel %vm39, 1, 0
  %v48 = vsel %vm40, 1, 0
  %v49 = vsel %vm41, 1, 0
  %v50 = vsel %vm42, 1, 0
  %v51 = vsel %vm43, 1, 0
  %v52 = vsel %vm44, 1, 0
  %v53 = vsel %vm45, 1, 0
  %v54 = vsel %vm46, 1, 0
  %v55 = vcvt.s32.f32 %v47
  %v56 = vcvt.s32.f32 %v48
  %v57 = vcvt.s32.f32 %v49
  %v58 = vcvt.s32.f32 %v50
  %v59 = vcvt.s32.f32 %v51
  %v60 = vcvt.s32.f32 %v52
  %v61 = vcvt.s32.f32 %v53
  %v62 = vcvt.s32.f32 %v54
  %v63 = vld [vmem:[%s1] sm:$0xff]
  %v64 = vld [vmem:[%s1 + $0x8] sm:$0xff]
  %v65 = vld [vmem:[%s1 + $0x10] sm:$0xff]
  %v66 = vld [vmem:[%s1 + $0x18] sm:$0xff]
  %v67 = vld [vmem:[%s2] sm:$0xff]
  %v68 = vld [vmem:[%s2 + $0x8] sm:$0xff]
  %v69 = vld [vmem:[%s2 + $0x10] sm:$0xff]
  %v70 = vld [vmem:[%s2 + $0x18] sm:$0xff]
  %72 = vset.pattern.permute.xlu0 0
  %73 = vperm.xlu0 %72, %v67
  %v74 = vpop.permute.xlu0 %73
  %77 = vset.pattern.permute.xlu0 0
  %78 = vperm.xlu0 %77, %v68
  %v79 = vpop.permute.xlu0 %78
  %82 = vset.pattern.permute.xlu0 0
  %83 = vperm.xlu0 %82, %v69
  %v84 = vpop.permute.xlu0 %83
  %87 = vset.pattern.permute.xlu0 0
  %88 = vperm.xlu0 %87, %v70
  %v89 = vpop.permute.xlu0 %88
  %vm91 = vcmask 523264
  %v93 = vsel %vm91, %v63, 0
  %v96 = vsel %vm91, %v64, 0
  %v99 = vsel %vm91, %v65, 0
  %v102 = vsel %vm91, %v66, 0
  %104 = vmatpush.msra.mxu0 0.0
  %105 = vmatpush.msra.mxu0 0.0
  %106 = vmatpush.msra.mxu0 0.0
  %107 = vmatpush.msra.mxu0 0.0
  %108 = vmatpush.msra.mxu0 0.0
  %109 = vmatpush.msra.mxu0 0.0
  %110 = vmatpush.msra.mxu0 0.0
  %111 = vmatpush.msra.mxu0 0.0
  %112 = vmatpush.msra.mxu0 %v62
  %113 = vmatpush.msra.mxu0 %v61
  %114 = vmatpush.msra.mxu0 %v60
  %115 = vmatpush.msra.mxu0 %v59
  %116 = vmatpush.msra.mxu0 %v58
  %117 = vmatpush.msra.mxu0 %v57
  %118 = vmatpush.msra.mxu0 %v56
  %119 = vmatpush.msra.mxu0 %v55
  %120 = vmatmul.f32.gmra.mxu0 %v93
  %v121 = vpop.f32.mrf.mxu0
  %v122 = vadd.f32 %v74, %v121
  %123 = vmatmul.f32.gmra.mxu0 %v96
  %v124 = vpop.f32.mrf.mxu0
  %v125 = vadd.f32 %v79, %v124
  %126 = vmatmul.f32.gmra.mxu0 %v99
  %v127 = vpop.f32.mrf.mxu0
  %v128 = vadd.f32 %v84, %v127
  %129 = vmatmul.f32.gmra.mxu0 %v102
  %v130 = vpop.f32.mrf.mxu0
  %v131 = vadd.f32 %v89, %v130
  %132 = vdwg.mxu0
  %v133 = vmax.f32 %v122, 0.0
  %v134 = vmax.f32 %v125, 0.0
  %v135 = vmax.f32 %v128, 0.0
  %v136 = vmax.f32 %v131, 0.0
  %v137 = vld [vmem:[%s3] sm:$0xff]
  %v138 = vld [vmem:[%s4] sm:$0xff]
  %140 = vset.pattern.permute.xlu0 0
  %141 = vperm.xlu0 %140, %v138
  %v142 = vpop.permute.xlu0 %141
  %vm144 = vcmask 261120
  %v146 = vsel %vm144, %v137, 0
  %148 = vmatpush.msra.mxu0 0.0
  %149 = vmatpush.msra.mxu0 0.0
  %150 = vmatpush.msra.mxu0 0.0
  %151 = vmatpush.msra.mxu0 0.0
  %152 = vmatpush.msra.mxu0 0.0
  %153 = vmatpush.msra.mxu0 0.0
  %154 = vmatpush.msra.mxu0 0.0
  %155 = vmatpush.msra.mxu0 0.0
  %156 = vmatpush.msra.mxu0 0.0
  %157 = vmatpush.msra.mxu0 0.0
  %158 = vmatpush.msra.mxu0 0.0
  %159 = vmatpush.msra.mxu0 0.0
  %160 = vmatpush.msra.mxu0 %v136
  %161 = vmatpush.msra.mxu0 %v135
  %162 = vmatpush.msra.mxu0 %v134
  %163 = vmatpush.msra.mxu0 %v133
  %164 = vmatmul.f32.gmra.mxu0 %v146
  %v165 = vpop.f32.mrf.mxu0
  %v166 = vadd.f32 %v142, %v165
  %167 = vdwg.mxu0
  %v168 = vmax.f32 %v166, 0.0
  %v169 = vld [vmem:[%s5] sm:$0xff]
  %171 = vset.pattern.permute.xlu0 0
  %172 = vperm.xlu0 %171, %v169
  %v173 = vpop.permute.xlu0 %172
  %v175 = vmul.f32 %v168, %v173
  %vm176 = vcmask 130048
  %v177 = vsel %vm176, %v175, 0.0
  %v178 = vrot.slane %v177, 4
  %v179 = vadd.f32 %v177, %v178
  %v180 = vrot.slane %v179, 2
  %v181 = vadd.f32 %v179, %v180
  %v182 = vrot.slane %v181, 1
  %v183 = vadd.f32 %v181, %v182
  %v184 = vld [vmem:[#allocation2] sm:$0x1]
  %186 = vset.pattern.permute.xlu0 0
  %187 = vperm.xlu0 %186, %v184
  %v188 = vpop.permute.xlu0 %187
  %v190 = vperm.slane %v188, 0
  %v191 = vadd.f32 %v183, %v190
  %v192 = vxor.u32 %v191, 2147483648
  %v193 = vmul.f32 %v192, 1.442695
  %v194 = vpow.pop %v193
  %v195 = vadd.f32 %v194, 1.0
  %v196 = vrcp.pop %v195
  %v197 = vmul.f32 %v195, %v196
  %v198 = vsub.f32 1.0, %v197
  %v199 = vmul.f32 %v196, %v198
  %v200 = vadd.f32 %v196, %v199
  %vm201 = vweird.f32 %v195
  %vm202 = vweird.f32 %v196
  %vm203 = vmor %vm201, %vm202
  %v204 = vsel %vm203, %v196, %v200
  %v205 = vand.u32 2147483647, %v195
  %vm206 = vcmp.eq.f32.partialorder %v205, 8.507059e+37
  %v207 = vand.u32 %v195, 2147483648
  %v208 = vor.u32 1.1754944e-38, %v207
  %v209 = vsel %vm206, %v208, %v204
  %v210 = vmul.f32 1.0, %v209
  %vm211 = vcmask 122880
  %212 = vst.msk [vmem:[%s7] sm:$0x1] %vm211, %v210
  // Predicated region
  $region30: #{endetect_forward.1} parent=0 // pred_check
    _
  $region31: #{endetect_forward.1} parent=0 // pred_check_branch
    %214 = sbr.rel (0) target = $region33
  $region32: #{endetect_forward.1} parent=0 // pred_region
    _
  $region33: #{endetect_forward.1} parent=0 // pred_fallthru
    _
  // Predicated region
  $region34: #{endetect_forward.1} parent=0 // pred_check
    _
  $region35: #{endetect_forward.1} parent=0 // pred_check_branch
    %216 = sbr.rel (0) target = $region37
  $region36: #{endetect_forward.1} parent=0 // pred_region
    _
  $region37: #{endetect_forward.1} parent=0 // pred_fallthru
    _

</llo_original>
